<compile_context>
chip_gen: v7x
topology: tpu7x:2x2x1
jax: 0.10.0
libtpu: 0.0.40
codegen_flags: <defaults>
</compile_context>

<pallas_src>
import functools

import jax
import jax.numpy as jnp
from jax.experimental import pallas as pl
from jax.experimental.pallas import tpu as pltpu

LOG_STD_MAX = 2.0
LOG_STD_MIN = -5.0
_LS_SCALE = 0.5 * (LOG_STD_MAX - LOG_STD_MIN)   # A
_LS_SHIFT = LOG_STD_MIN + _LS_SCALE             # C ;  A*tanh(z)+C == original affine


def _round_up(x, m):
    return ((x + m - 1) // m) * m


def actor_kernel(x_ref, w1_ref, b1_ref, w2_ref, b2_ref, wh_ref, bh_ref,
                 mean_ref, ls_ref):
    wdt = w1_ref.dtype   # bfloat16

    # fc1 + relu. State arrives f32; cast to bf16 here (VPU) instead of as a
    # separate wrapper-side XLA op. f32 MXU accumulation, f32 elementwise.
    x = x_ref[...].astype(wdt)
    h1 = jnp.dot(x, w1_ref[...], preferred_element_type=jnp.float32) + b1_ref[...]
    h1 = jnp.maximum(h1, 0.0)

    # fc2 + relu
    h2 = jnp.dot(h1.astype(wdt), w2_ref[...],
                 preferred_element_type=jnp.float32) + b2_ref[...]
    h2 = jnp.maximum(h2, 0.0)

    # Fused, lane-padded heads: z[:, :P] = mean, z[:, P:] = raw log_std.
    z = jnp.dot(h2.astype(wdt), wh_ref[...],
                preferred_element_type=jnp.float32) + bh_ref[...]

    P = mean_ref.shape[1]                      # 128-lane-aligned head width
    mean_ref[...] = z[:, :P].astype(mean_ref.dtype)
    # tanh (EUP) only on the log_std half; single fused multiply-add into range.
    ls_ref[...] = (_LS_SCALE * jnp.tanh(z[:, P:]) + _LS_SHIFT).astype(ls_ref.dtype)


def prepare_params(params):
    """One-time weight prep, hoisted out of the forward hot path:
    bf16 casts, fc_mean/fc_logstd fusion, zero-padding to 128-lane heads."""
    wdt = jnp.bfloat16
    obs_dim, hidden = params["w1"].shape
    act_dim = params["wm"].shape[1]
    P = _round_up(act_dim, 128)                # lane-dense head half-width

    def pad_cols(a, width):
        return jnp.pad(a, ((0, 0), (0, width - a.shape[1])))

    wh = jnp.concatenate([pad_cols(params["wm"], P),
                          pad_cols(params["wl"], P)], axis=1).astype(wdt)
    bh = jnp.concatenate([pad_cols(params["bm"], P),
                          pad_cols(params["bl"], P)], axis=1).astype(jnp.float32)
    return dict(
        w1=params["w1"].astype(wdt), b1=params["b1"].astype(jnp.float32),
        w2=params["w2"].astype(wdt), b2=params["b2"].astype(jnp.float32),
        wh=wh, bh=bh,
        obs_dim=obs_dim, hidden=hidden, act_dim=act_dim, head_pad=P)


def actor_forward(state, prepped, *, max_block_b=2048):
    """state: [B, obs_dim] float32. prepped: from prepare_params().
    Returns (mean, log_std), each [B, act_dim] float32."""
    B, obs_dim = state.shape
    hidden = prepped["hidden"]
    act_dim = prepped["act_dim"]
    P = prepped["head_pad"]

    # Batch tiling: single block for small/medium batches (zero extra grid
    # overhead); otherwise >=2 blocks so v7x megacore gets both TensorCores,
    # capped at 2048 rows (mult. of 16) so f32 h1/h2/z intermediates fit VMEM.
    if B <= 1024:
        tb = B
    else:
        tb = min(_round_up(pl.cdiv(B, 2), 16), max_block_b)
    grid = (pl.cdiv(B, tb),)
    resident = lambda i: (0, 0)   # weights / biases stay VMEM-resident across steps
    # TODO(synk): could add pipeline_mode=pl.Buffered(1) on the resident weight
    # specs to drop their redundant second buffer (~300 KB); left at default.

    mean_p, ls_p = pl.pallas_call(
        actor_kernel,
        out_shape=(jax.ShapeDtypeStruct((B, P), jnp.float32),
                   jax.ShapeDtypeStruct((B, P), jnp.float32)),
        grid_spec=pltpu.PrefetchScalarGridSpec(
            num_scalar_prefetch=0,
            grid=grid,
            in_specs=[
                pl.BlockSpec((tb, obs_dim), lambda i: (i, 0)),   # state tile (f32)
                pl.BlockSpec((obs_dim, hidden), resident),       # w1 (bf16)
                pl.BlockSpec((1, hidden), resident),             # b1
                pl.BlockSpec((hidden, hidden), resident),        # w2
                pl.BlockSpec((1, hidden), resident),             # b2
                pl.BlockSpec((hidden, 2 * P), resident),         # [wm | wl] padded
                pl.BlockSpec((1, 2 * P), resident),              # [bm | bl] padded
            ],
            out_specs=[
                pl.BlockSpec((tb, P), lambda i: (i, 0)),         # mean (lane-dense)
                pl.BlockSpec((tb, P), lambda i: (i, 0)),         # log_std
            ],
        ),
        compiler_params=pltpu.CompilerParams(
            dimension_semantics=("parallel",),
            vmem_limit_bytes=32 * 1024 * 1024),
    )(state, prepped["w1"], prepped["b1"], prepped["w2"], prepped["b2"],
      prepped["wh"], prepped["bh"])

    # Drop lane padding. log_std slice starts on a 128-lane boundary.
    return mean_p[:, :act_dim], ls_p[:, :act_dim]


def init_params(key, obs_dim, act_dim, hidden_dim=256):
    """Deterministic synthetic init (PyTorch-Linear-style uniform ±1/sqrt(fan_in))."""
    def linear(k, fan_in, fan_out):
        kw, kb = jax.random.split(k)
        bound = 1.0 / jnp.sqrt(fan_in)
        w = jax.random.uniform(kw, (fan_in, fan_out), jnp.float32, -bound, bound)
        b = jax.random.uniform(kb, (1, fan_out), jnp.float32, -bound, bound)
        return w, b

    k1, k2, k3, k4 = jax.random.split(key, 4)
    w1, b1 = linear(k1, obs_dim, hidden_dim)
    w2, b2 = linear(k2, hidden_dim, hidden_dim)
    wm, bm = linear(k3, hidden_dim, act_dim)
    wl, bl = linear(k4, hidden_dim, act_dim)
    return dict(w1=w1, b1=b1, w2=w2, b2=b2, wm=wm, bm=bm, wl=wl, bl=bl)


def actor_forward_ref_bf16(state, p):
    """Same bf16-operand / f32-accumulate math as the kernel (tight check)."""
    wdt = jnp.bfloat16
    x = state.astype(wdt)
    h1 = jnp.maximum(jnp.dot(x, p["w1"].astype(wdt),
                             preferred_element_type=jnp.float32) + p["b1"], 0.0)
    h2 = jnp.maximum(jnp.dot(h1.astype(wdt), p["w2"].astype(wdt),
                             preferred_element_type=jnp.float32) + p["b2"], 0.0)
    mean = jnp.dot(h2.astype(wdt), p["wm"].astype(wdt),
                   preferred_element_type=jnp.float32) + p["bm"]
    ls = jnp.tanh(jnp.dot(h2.astype(wdt), p["wl"].astype(wdt),
                          preferred_element_type=jnp.float32) + p["bl"])
    ls = LOG_STD_MIN + 0.5 * (LOG_STD_MAX - LOG_STD_MIN) * (ls + 1.0)
    return mean, ls


def actor_forward_ref_f32(state, p):
    """Original full-f32 torch semantics (loose sanity check for the bf16 path)."""
    h1 = jnp.maximum(state @ p["w1"] + p["b1"], 0.0)
    h2 = jnp.maximum(h1 @ p["w2"] + p["b2"], 0.0)
    mean = h2 @ p["wm"] + p["bm"]
    ls = jnp.tanh(h2 @ p["wl"] + p["bl"])
    ls = LOG_STD_MIN + 0.5 * (LOG_STD_MAX - LOG_STD_MIN) * (ls + 1.0)
    return mean, ls


if __name__ == "__main__":
    key = jax.random.PRNGKey(0)
    k_params, k_state = jax.random.split(key)

    B, obs_dim, act_dim, hidden_dim = 8, 16, 8, 256
    params = init_params(k_params, obs_dim, act_dim, hidden_dim)
    state = jax.random.normal(k_state, (B, obs_dim), jnp.float32)

    # One-time weight prep (bf16 cast + head fusion/padding) outside the hot path.
    prepped = prepare_params(params)
    jax.block_until_ready(prepped)

    mean, log_std = actor_forward(state, prepped)
    jax.block_until_ready((mean, log_std))

    assert mean.shape == (B, act_dim) and log_std.shape == (B, act_dim)

    # Tight check vs. a reference using the identical bf16-operand math.
    mean_bf, ls_bf = actor_forward_ref_bf16(state, params)
    assert jnp.allclose(mean, mean_bf, atol=2e-3, rtol=2e-3)
    assert jnp.allclose(log_std, ls_bf, atol=2e-3, rtol=2e-3)

    # Loose check vs. the original full-f32 torch semantics.
    mean_f32, ls_f32 = actor_forward_ref_f32(state, params)
    assert jnp.allclose(mean, mean_f32, atol=5e-2, rtol=5e-2)
    assert jnp.allclose(log_std, ls_f32, atol=5e-2, rtol=5e-2)

    assert bool(jnp.all(log_std >= LOG_STD_MIN)) and bool(jnp.all(log_std <= LOG_STD_MAX))

    # TODO(synk): get_action's Normal.rsample / log_prob sampling path is host-side
    # stochastic glue and is intentionally left outside the forward kernel.
    print("KERNEL_OK")
</pallas_src>

<mosaic_0001>
module attributes {stable_mosaic.version = 11 : i64} {
  func.func @actor_kernel(%arg0: i32, %arg1: memref<8x16xf32, #tpu.memory_space<vmem>>, %arg2: memref<16x256xbf16, #tpu.memory_space<vmem>>, %arg3: memref<1x256xf32, #tpu.memory_space<vmem>>, %arg4: memref<256x256xbf16, #tpu.memory_space<vmem>>, %arg5: memref<1x256xf32, #tpu.memory_space<vmem>>, %arg6: memref<256x256xbf16, #tpu.memory_space<vmem>>, %arg7: memref<1x256xf32, #tpu.memory_space<vmem>>, %arg8: memref<8x128xf32, #tpu.memory_space<vmem>>, %arg9: memref<8x128xf32, #tpu.memory_space<vmem>>) attributes {dimension_semantics = [#tpu.dimension_semantics<parallel>], iteration_bounds = array<i64: 1>, scalar_prefetch = 0 : i64, scratch_operands = 0 : i64, tpu.core_type = #tpu.core_type<tc>, window_params = [{transform_indices = @transform_0, window_bounds = array<i64: 8, 16>}, {pipeline_mode = #tpu.pipeline_mode<synchronous>, transform_indices = @transform_1, window_bounds = array<i64: 16, 256>}, {pipeline_mode = #tpu.pipeline_mode<synchronous>, transform_indices = @transform_2, window_bounds = array<i64: 1, 256>}, {pipeline_mode = #tpu.pipeline_mode<synchronous>, transform_indices = @transform_3, window_bounds = array<i64: 256, 256>}, {pipeline_mode = #tpu.pipeline_mode<synchronous>, transform_indices = @transform_4, window_bounds = array<i64: 1, 256>}, {pipeline_mode = #tpu.pipeline_mode<synchronous>, transform_indices = @transform_5, window_bounds = array<i64: 256, 256>}, {pipeline_mode = #tpu.pipeline_mode<synchronous>, transform_indices = @transform_6, window_bounds = array<i64: 1, 256>}, {transform_indices = @transform_7, window_bounds = array<i64: 8, 128>}, {transform_indices = @transform_8, window_bounds = array<i64: 8, 128>}]} {
    %c0 = arith.constant 0 : index
    %c0_0 = arith.constant 0 : index
    %0 = vector.load %arg1[%c0, %c0_0] : memref<8x16xf32, #tpu.memory_space<vmem>>, vector<8x16xf32>
    %1 = arith.truncf %0 : vector<8x16xf32> to vector<8x16xbf16>
    %c0_1 = arith.constant 0 : index
    %c0_2 = arith.constant 0 : index
    %2 = vector.load %arg2[%c0_1, %c0_2] : memref<16x256xbf16, #tpu.memory_space<vmem>>, vector<16x256xbf16>
    %cst = arith.constant dense<0.000000e+00> : vector<8x256xf32>
    %3 = tpu.matmul %1, %2, %cst {dimension_numbers = #tpu.dot_dimension_numbers<[1], [0], [0], [1], [0, 0, 1, 1], [], []>} : vector<8x16xbf16>, vector<16x256xbf16>, vector<8x256xf32> -> vector<8x256xf32>
    %c0_3 = arith.constant 0 : index
    %c0_4 = arith.constant 0 : index
    %4 = vector.load %arg3[%c0_3, %c0_4] : memref<1x256xf32, #tpu.memory_space<vmem>>, vector<1x256xf32>
    %5 = vector.broadcast %4 : vector<1x256xf32> to vector<8x256xf32>
    %6 = arith.addf %3, %5 : vector<8x256xf32>
    %cst_5 = arith.constant 0.000000e+00 : f32
    %7 = vector.broadcast %cst_5 : f32 to vector<8x256xf32>
    %8 = arith.maximumf %6, %7 : vector<8x256xf32>
    %9 = arith.truncf %8 : vector<8x256xf32> to vector<8x256xbf16>
    %c0_6 = arith.constant 0 : index
    %c0_7 = arith.constant 0 : index
    %10 = vector.load %arg4[%c0_6, %c0_7] : memref<256x256xbf16, #tpu.memory_space<vmem>>, vector<256x256xbf16>
    %cst_8 = arith.constant dense<0.000000e+00> : vector<8x256xf32>
    %11 = tpu.matmul %9, %10, %cst_8 {dimension_numbers = #tpu.dot_dimension_numbers<[1], [0], [0], [1], [0, 0, 1, 1], [], []>} : vector<8x256xbf16>, vector<256x256xbf16>, vector<8x256xf32> -> vector<8x256xf32>
    %c0_9 = arith.constant 0 : index
    %c0_10 = arith.constant 0 : index
    %12 = vector.load %arg5[%c0_9, %c0_10] : memref<1x256xf32, #tpu.memory_space<vmem>>, vector<1x256xf32>
    %13 = vector.broadcast %12 : vector<1x256xf32> to vector<8x256xf32>
    %14 = arith.addf %11, %13 : vector<8x256xf32>
    %cst_11 = arith.constant 0.000000e+00 : f32
    %15 = vector.broadcast %cst_11 : f32 to vector<8x256xf32>
    %16 = arith.maximumf %14, %15 : vector<8x256xf32>
    %17 = arith.truncf %16 : vector<8x256xf32> to vector<8x256xbf16>
    %c0_12 = arith.constant 0 : index
    %c0_13 = arith.constant 0 : index
    %18 = vector.load %arg6[%c0_12, %c0_13] : memref<256x256xbf16, #tpu.memory_space<vmem>>, vector<256x256xbf16>
    %cst_14 = arith.constant dense<0.000000e+00> : vector<8x256xf32>
    %19 = tpu.matmul %17, %18, %cst_14 {dimension_numbers = #tpu.dot_dimension_numbers<[1], [0], [0], [1], [0, 0, 1, 1], [], []>} : vector<8x256xbf16>, vector<256x256xbf16>, vector<8x256xf32> -> vector<8x256xf32>
    %c0_15 = arith.constant 0 : index
    %c0_16 = arith.constant 0 : index
    %20 = vector.load %arg7[%c0_15, %c0_16] : memref<1x256xf32, #tpu.memory_space<vmem>>, vector<1x256xf32>
    %21 = vector.broadcast %20 : vector<1x256xf32> to vector<8x256xf32>
    %22 = arith.addf %19, %21 : vector<8x256xf32>
    %23 = vector.extract_strided_slice %22 {offsets = [0, 0], sizes = [8, 128], strides = [1, 1]} : vector<8x256xf32> to vector<8x128xf32>
    %c0_17 = arith.constant 0 : index
    %c0_18 = arith.constant 0 : index
    %24 = vector.load %arg8[%c0_17, %c0_18] : memref<8x128xf32, #tpu.memory_space<vmem>>, vector<8x128xf32>
    tpu.vector_store %arg8[%c0_17, %c0_18], %23 {strides = array<i32>} : memref<8x128xf32, #tpu.memory_space<vmem>>, vector<8x128xf32>,
    %25 = vector.extract_strided_slice %22 {offsets = [0, 128], sizes = [8, 128], strides = [1, 1]} : vector<8x256xf32> to vector<8x128xf32>
    %26 = math.tanh %25 : vector<8x128xf32>
    %cst_19 = arith.constant 3.500000e+00 : f32
    %27 = vector.broadcast %cst_19 : f32 to vector<8x128xf32>
    %28 = arith.mulf %27, %26 : vector<8x128xf32>
    %cst_20 = arith.constant -1.500000e+00 : f32
    %29 = vector.broadcast %cst_20 : f32 to vector<8x128xf32>
    %30 = arith.addf %28, %29 : vector<8x128xf32>
    %c0_21 = arith.constant 0 : index
    %c0_22 = arith.constant 0 : index
    %31 = vector.load %arg9[%c0_21, %c0_22] : memref<8x128xf32, #tpu.memory_space<vmem>>, vector<8x128xf32>
    tpu.vector_store %arg9[%c0_21, %c0_22], %30 {strides = array<i32>} : memref<8x128xf32, #tpu.memory_space<vmem>>, vector<8x128xf32>,
    return
  }
  func.func @transform_0(%arg0: i32) -> (i32, i32) {
    %c0_i32 = arith.constant 0 : i32
    %c0_i32_0 = arith.constant 0 : i32
    return %arg0, %c0_i32 : i32, i32
  }
  func.func @transform_1(%arg0: i32) -> (i32, i32) {
    %c0_i32 = arith.constant 0 : i32
    %c0_i32_0 = arith.constant 0 : i32
    %c0_i32_1 = arith.constant 0 : i32
    return %c0_i32, %c0_i32_0 : i32, i32
  }
  func.func @transform_2(%arg0: i32) -> (i32, i32) {
    %c0_i32 = arith.constant 0 : i32
    %c0_i32_0 = arith.constant 0 : i32
    %c0_i32_1 = arith.constant 0 : i32
    return %c0_i32, %c0_i32_0 : i32, i32
  }
  func.func @transform_3(%arg0: i32) -> (i32, i32) {
    %c0_i32 = arith.constant 0 : i32
    %c0_i32_0 = arith.constant 0 : i32
    %c0_i32_1 = arith.constant 0 : i32
    return %c0_i32, %c0_i32_0 : i32, i32
  }
  func.func @transform_4(%arg0: i32) -> (i32, i32) {
    %c0_i32 = arith.constant 0 : i32
    %c0_i32_0 = arith.constant 0 : i32
    %c0_i32_1 = arith.constant 0 : i32
    return %c0_i32, %c0_i32_0 : i32, i32
  }
  func.func @transform_5(%arg0: i32) -> (i32, i32) {
    %c0_i32 = arith.constant 0 : i32
    %c0_i32_0 = arith.constant 0 : i32
    %c0_i32_1 = arith.constant 0 : i32
    return %c0_i32, %c0_i32_0 : i32, i32
  }
  func.func @transform_6(%arg0: i32) -> (i32, i32) {
    %c0_i32 = arith.constant 0 : i32
    %c0_i32_0 = arith.constant 0 : i32
    %c0_i32_1 = arith.constant 0 : i32
    return %c0_i32, %c0_i32_0 : i32, i32
  }
  func.func @transform_7(%arg0: i32) -> (i32, i32) {
    %c0_i32 = arith.constant 0 : i32
    %c0_i32_0 = arith.constant 0 : i32
    return %arg0, %c0_i32 : i32, i32
  }
  func.func @transform_8(%arg0: i32) -> (i32, i32) {
    %c0_i32 = arith.constant 0 : i32
    %c0_i32_0 = arith.constant 0 : i32
    return %arg0, %c0_i32 : i32, i32
  }
}

</mosaic_0001>

<llo_original>
// kernel: tpu_custom_call.1
$region0: #{tpu_custom_call.1}
  #allocation0 [shape = 'u32[]', space=smem, size = 0x4, offset = 0x4, fixed_abs, tag = 'smem constant byte address 0x4 - core index']
  #allocation1 [shape = 'u32[144,128]{1,0:T(1,128)}', space=vmem, size = 0x12000, scoped, tag = 'internal scratch']
  %s0 = inlined_call_operand.hbm [shape: f32[8,16], index: 0, kind: input, shape index: {}]
  %s1 = inlined_call_operand.hbm [shape: bf16[16,256], index: 1, kind: input, shape index: {}]
  %s2 = inlined_call_operand.vmem [shape: f32[1,256], index: 2, kind: input, shape index: {}]
  %s3 = inlined_call_operand.hbm [shape: bf16[256,256], index: 3, kind: input, shape index: {}]
  %s4 = inlined_call_operand.vmem [shape: f32[1,256], index: 4, kind: input, shape index: {}]
  %s5 = inlined_call_operand.hbm [shape: bf16[256,256], index: 5, kind: input, shape index: {}]
  %s6 = inlined_call_operand.vmem [shape: f32[1,256], index: 6, kind: input, shape index: {}]
  %s7 = inlined_call_operand.hbm [shape: f32[8,128], index: 7, kind: output, shape index: {0}]
  %s8 = inlined_call_operand.hbm [shape: f32[8,128], index: 8, kind: output, shape index: {1}]
  %9 = xla_tuple %s7, %s8
  %s10 = sld [smem:[#allocation0]]
  $region62: #{tpu_custom_call.1} parent=0
    _
  %s12 = ssub.s32 1, %s10
  %s13 = scalar_select 0, %s12, %s10
  $region1: #{tpu_custom_call.1} parent=0
    #allocation2 [shape = 'u8[4096]{0}', space=vmem, size = 0x1000, scoped, tag = 'input window, operand 0, single buffered']
    #allocation3 [shape = 's32[1]{0}', space=sflag, size = 0x4, scoped, tag = 'scoped memory for tpu_custom_call.1']
    #allocation4 [shape = 's32[1]{0}', space=sflag, size = 0x4, scoped, tag = 'scoped memory for tpu_custom_call.1']
    #allocation5 [shape = 'u8[8192]{0}', space=vmem, size = 0x2000, scoped, tag = 'input window, operand 1, single buffered']
    #allocation6 [shape = 's32[1]{0}', space=sflag, size = 0x4, scoped, tag = 'scoped memory for tpu_custom_call.1']
    #allocation7 [shape = 'u8[131072]{0}', space=vmem, size = 0x20000, scoped, tag = 'input window, operand 3, single buffered']
    #allocation8 [shape = 'u8[131072]{0}', space=vmem, size = 0x20000, scoped, tag = 'input window, operand 5, single buffered']
    #allocation9 [shape = 's32[1]{0}', space=sflag, size = 0x4, scoped, tag = 'scoped memory for tpu_custom_call.1']
    #allocation10 [shape = 'u8[4096]{0}', space=vmem, size = 0x1000, scoped, tag = 'output window, operand 0, single buffered']
    #allocation11 [shape = 'u8[4096]{0}', space=vmem, size = 0x1000, scoped, tag = 'output window, operand 1, single buffered']
    #allocation12 [shape = 's32[1]{0}', space=sflag, size = 0x4, scoped, tag = 'scoped memory for tpu_custom_call.1']
    %14 = vsyncpa [#allocation3], 0
    %15 = vsyncpa [#allocation6], 0
    %16 = vsyncpa [#allocation9], 0
    %17 = vsyncpa [#allocation4], 0
    %18 = vsyncpa [#allocation12], 0
    // Predicated region
    $region2: #{tpu_custom_call.1} parent=1 // pred_check
      _
    $region3: #{tpu_custom_call.1} parent=1 // pred_check_branch
      %20 = sbr.rel (0) target = $region5
    $region4: #{tpu_custom_call.1} parent=1 // pred_region
      %s22 = ssub.s32 128, 128
      %23 = vsyncadd [#allocation3], %s22
      %s25 = sshll.u32 [#allocation2], 4
      %s26 = int_to_ptr.vmem [resolvable:$true] %s25
      %28 = dma.hbm_to_vmem [thread:$0]  %s0, 128, %s26, [#allocation3]
    $region5: #{tpu_custom_call.1} parent=1 // pred_fallthru
      _
    // Predicated region
    $region6: #{tpu_custom_call.1} parent=1 // pred_check
      _
    $region7: #{tpu_custom_call.1} parent=1 // pred_check_branch
      %30 = sbr.rel (0) target = $region9
    $region8: #{tpu_custom_call.1} parent=1 // pred_region
      %s32 = ssub.s32 256, 256
      %33 = vsyncadd [#allocation6], %s32
      %s34 = sshll.u32 [#allocation5], 4
      %s35 = int_to_ptr.vmem [resolvable:$true] %s34
      %40 = dma.hbm_to_vmem [thread:$0]  %s1, 256, %s35, [#allocation6], 128, 128, 8
    $region9: #{tpu_custom_call.1} parent=1 // pred_fallthru
      _
    // Predicated region
    $region10: #{tpu_custom_call.1} parent=1 // pred_check
      _
    $region11: #{tpu_custom_call.1} parent=1 // pred_check_branch
      %42 = sbr.rel (0) target = $region13
    $region12: #{tpu_custom_call.1} parent=1 // pred_region
      _
    $region13: #{tpu_custom_call.1} parent=1 // pred_fallthru
      _
    // Predicated region
    $region14: #{tpu_custom_call.1} parent=1 // pred_check
      _
    $region15: #{tpu_custom_call.1} parent=1 // pred_check_branch
      %44 = sbr.rel (0) target = $region17
    $region16: #{tpu_custom_call.1} parent=1 // pred_region
      %s46 = ssub.s32 4096, 4096
      %47 = vsyncadd [#allocation6], %s46
      %s48 = sshll.u32 [#allocation7], 4
      %s49 = int_to_ptr.vmem [resolvable:$true] %s48
      %54 = dma.hbm_to_vmem [thread:$0]  %s3, 4096, %s49, [#allocation6], 128, 128, 8
    $region17: #{tpu_custom_call.1} parent=1 // pred_fallthru
      _
    // Predicated region
    $region18: #{tpu_custom_call.1} parent=1 // pred_check
      _
    $region19: #{tpu_custom_call.1} parent=1 // pred_check_branch
      %56 = sbr.rel (0) target = $region21
    $region20: #{tpu_custom_call.1} parent=1 // pred_region
      _
    $region21: #{tpu_custom_call.1} parent=1 // pred_fallthru
      _
    // Predicated region
    $region22: #{tpu_custom_call.1} parent=1 // pred_check
      _
    $region23: #{tpu_custom_call.1} parent=1 // pred_check_branch
      %58 = sbr.rel (0) target = $region25
    $region24: #{tpu_custom_call.1} parent=1 // pred_region
      %s60 = ssub.s32 4096, 4096
      %61 = vsyncadd [#allocation9], %s60
      %s62 = sshll.u32 [#allocation8], 4
      %s63 = int_to_ptr.vmem [resolvable:$true] %s62
      %68 = dma.hbm_to_vmem [thread:$0]  %s5, 4096, %s63, [#allocation9], 128, 128, 8
    $region25: #{tpu_custom_call.1} parent=1 // pred_fallthru
      _
    // Predicated region
    $region26: #{tpu_custom_call.1} parent=1 // pred_check
      _
    $region27: #{tpu_custom_call.1} parent=1 // pred_check_branch
      %70 = sbr.rel (0) target = $region29
    $region28: #{tpu_custom_call.1} parent=1 // pred_region
      _
    $region29: #{tpu_custom_call.1} parent=1 // pred_fallthru
      _
    // Predicated region
    $region30: #{tpu_custom_call.1} parent=1 // pred_check
      _
    $region31: #{tpu_custom_call.1} parent=1 // pred_check_branch
      %72 = sbr.rel (0) target = $region33
    $region32: #{tpu_custom_call.1} parent=1 // pred_region
      %73 = dma.done [#allocation3], 128
    $region33: #{tpu_custom_call.1} parent=1 // pred_fallthru
      _
    // Predicated region
    $region34: #{tpu_custom_call.1} parent=1 // pred_check
      _
    $region35: #{tpu_custom_call.1} parent=1 // pred_check_branch
      %75 = sbr.rel (0) target = $region37
    $region36: #{tpu_custom_call.1} parent=1 // pred_region
      %76 = dma.done [#allocation6], 256
    $region37: #{tpu_custom_call.1} parent=1 // pred_fallthru
      _
    // Predicated region
    $region38: #{tpu_custom_call.1} parent=1 // pred_check
      _
    $region39: #{tpu_custom_call.1} parent=1 // pred_check_branch
      %78 = sbr.rel (0) target = $region41
    $region40: #{tpu_custom_call.1} parent=1 // pred_region
      %79 = dma.done [#allocation6], 4096
    $region41: #{tpu_custom_call.1} parent=1 // pred_fallthru
      _
    // Predicated region
    $region42: #{tpu_custom_call.1} parent=1 // pred_check
      _
    $region43: #{tpu_custom_call.1} parent=1 // pred_check_branch
      %81 = sbr.rel (0) target = $region45
    $region44: #{tpu_custom_call.1} parent=1 // pred_region
      %82 = dma.done [#allocation9], 4096
    $region45: #{tpu_custom_call.1} parent=1 // pred_fallthru
      _
    %v84 = vld [vmem:[#allocation2] sm:$0xff]
    %v85 = vpack.c.bf16 %v84, %v84
    %v86 = vld [vmem:[#allocation5] sm:$0xff]
    %v87 = vld [vmem:[#allocation5 + $0x8] sm:$0xff]
    %v88 = vld [vmem:[%s2] sm:$0x3]
    %v90 = vlaneseq
    %v91 = vshrl.u32 %v90, 7
    %v92 = vsub.s32 0, %v91
    %v93 = vrot.slane %v88, %v92
    %v94 = vlaneseq
    %v95 = vshrl.u32 %v94, 7
    %v96 = vsub.s32 1, %v95
    %v97 = vrot.slane %v88, %v96
    %v102 = vunpack.c.l.b16 %v86
    %v103 = vunpack.c.h.b16 %v86
    %v104 = vunpack.c.l.b16 %v87
    %v105 = vunpack.c.h.b16 %v87
    %v106 = vpack.c.b16 %v104, %v102
    %v107 = vpack.c.b16 %v105, %v103
    %vm110 = vcmask 130048
    %v112 = vsel %vm110, %v85, 0
    %114 = vmatprep.subr.bf16.mxu0 %v107
    %115 = vmatpush1.bf16.msra.mxu0 %v106
    %116 = vmatprep.subr.bf16.mxu0 0
    %117 = vmatpush1.bf16.msra.mxu0 0
    %118 = vmatprep.subr.bf16.mxu0 0
    %119 = vmatpush1.bf16.msra.mxu0 0
    %120 = vmatprep.subr.bf16.mxu0 0
    %121 = vmatpush1.bf16.msra.mxu0 0
    %122 = vmatprep.subr.bf16.mxu0 0
    %123 = vmatpush1.bf16.msra.mxu0 0
    %124 = vmatprep.subr.bf16.mxu0 0
    %125 = vmatpush1.bf16.msra.mxu0 0
    %126 = vmatprep.subr.bf16.mxu0 0
    %127 = vmatpush1.bf16.msra.mxu0 0
    %128 = vmatprep.subr.bf16.mxu0 0
    %129 = vmatpush1.bf16.msra.mxu0 0
    %130 = vmatprep.subr.bf16.mxu0 0
    %131 = vmatpush1.bf16.msra.mxu0 0
    %132 = vmatprep.subr.bf16.mxu0 0
    %133 = vmatpush1.bf16.msra.mxu0 0
    %134 = vmatprep.subr.bf16.mxu0 0
    %135 = vmatpush1.bf16.msra.mxu0 0
    %136 = vmatprep.subr.bf16.mxu0 0
    %137 = vmatpush1.bf16.msra.mxu0 0
    %138 = vmatprep.subr.bf16.mxu0 0
    %139 = vmatpush1.bf16.msra.mxu0 0
    %140 = vmatprep.subr.bf16.mxu0 0
    %141 = vmatpush1.bf16.msra.mxu0 0
    %142 = vmatprep.subr.bf16.mxu0 0
    %143 = vmatpush1.bf16.msra.mxu0 0
    %144 = vmatprep.subr.bf16.mxu0 0
    %145 = vmatpush1.bf16.msra.mxu0 0
    %146 = vmatprep.mubr.bf16.mxu0 0
    %147 = vmatmul.mubr.bf16.gmra.mrb[0].mxu0 %v112
    %v148 = vpop.f32.mrb[0].mxu0
    %v149 = vadd.f32 %v93, %v148
    %v150 = vpop.f32.mrb[0].mxu0
    %v151 = vadd.f32 %v97, %v150
    %v152 = vpop.f32.mrb[0].mxu0
    %v153 = vpop.f32.mrb[0].mxu0
    %154 = vdwg.mxu0
    %v155 = vmax.f32 %v149, 0.0
    %v156 = vmax.f32 %v151, 0.0
    %v157 = vpack.c.bf16 %v155, %v155
    %v158 = vpack.c.bf16 %v156, %v156
    %v159 = vld [vmem:[#allocation7] sm:$0xff]
    %v160 = vld [vmem:[#allocation7 + $0x8] sm:$0xff]
    %v161 = vld [vmem:[#allocation7 + $0x10] sm:$0xff]
    %v162 = vld [vmem:[#allocation7 + $0x18] sm:$0xff]
    %v163 = vld [vmem:[#allocation7 + $0x20] sm:$0xff]
    %v164 = vld [vmem:[#allocation7 + $0x28] sm:$0xff]
    %v165 = vld [vmem:[#allocation7 + $0x30] sm:$0xff]
    %v166 = vld [vmem:[#allocation7 + $0x38] sm:$0xff]
    %v167 = vld [vmem:[#allocation7 + $0x40] sm:$0xff]
    %v168 = vld [vmem:[#allocation7 + $0x48] sm:$0xff]
    %v169 = vld [vmem:[#allocation7 + $0x50] sm:$0xff]
    %v170 = vld [vmem:[#allocation7 + $0x58] sm:$0xff]
    %v171 = vld [vmem:[#allocation7 + $0x60] sm:$0xff]
    %v172 = vld [vmem:[#allocation7 + $0x68] sm:$0xff]
    %v173 = vld [vmem:[#allocation7 + $0x70] sm:$0xff]
    %v174 = vld [vmem:[#allocation7 + $0x78] sm:$0xff]
    %v175 = vld [vmem:[#allocation7 + $0x80] sm:$0xff]
    %v176 = vld [vmem:[#allocation7 + $0x88] sm:$0xff]
    %v177 = vld [vmem:[#allocation7 + $0x90] sm:$0xff]
    %v178 = vld [vmem:[#allocation7 + $0x98] sm:$0xff]
    %v179 = vld [vmem:[#allocation7 + $0xa0] sm:$0xff]
    %v180 = vld [vmem:[#allocation7 + $0xa8] sm:$0xff]
    %v181 = vld [vmem:[#allocation7 + $0xb0] sm:$0xff]
    %v182 = vld [vmem:[#allocation7 + $0xb8] sm:$0xff]
    %v183 = vld [vmem:[#allocation7 + $0xc0] sm:$0xff]
    %v184 = vld [vmem:[#allocation7 + $0xc8] sm:$0xff]
    %v185 = vld [vmem:[#allocation7 + $0xd0] sm:$0xff]
    %v186 = vld [vmem:[#allocation7 + $0xd8] sm:$0xff]
    %v187 = vld [vmem:[#allocation7 + $0xe0] sm:$0xff]
    %v188 = vld [vmem:[#allocation7 + $0xe8] sm:$0xff]
    %v189 = vld [vmem:[#allocation7 + $0xf0] sm:$0xff]
    %v190 = vld [vmem:[#allocation7 + $0xf8] sm:$0xff]
    %v191 = vld [vmem:[%s4] sm:$0x3]
    %v193 = vlaneseq
    %v194 = vshrl.u32 %v193, 7
    %v195 = vsub.s32 0, %v194
    %v196 = vrot.slane %v191, %v195
    %v197 = vlaneseq
    %v198 = vshrl.u32 %v197, 7
    %v199 = vsub.s32 1, %v198
    %v200 = vrot.slane %v191, %v199
    %v235 = vunpack.c.l.b16 %v159
    %v236 = vunpack.c.h.b16 %v159
    %v237 = vunpack.c.l.b16 %v160
    %v238 = vunpack.c.h.b16 %v160
    %v239 = vunpack.c.l.b16 %v161
    %v240 = vunpack.c.h.b16 %v161
    %v241 = vunpack.c.l.b16 %v162
    %v242 = vunpack.c.h.b16 %v162
    %v243 = vunpack.c.l.b16 %v163
    %v244 = vunpack.c.h.b16 %v163
    %v245 = vunpack.c.l.b16 %v164
    %v246 = vunpack.c.h.b16 %v164
    %v247 = vunpack.c.l.b16 %v165
    %v248 = vunpack.c.h.b16 %v165
    %v249 = vunpack.c.l.b16 %v166
    %v250 = vunpack.c.h.b16 %v166
    %v251 = vunpack.c.l.b16 %v167
    %v252 = vunpack.c.h.b16 %v167
    %v253 = vunpack.c.l.b16 %v168
    %v254 = vunpack.c.h.b16 %v168
    %v255 = vunpack.c.l.b16 %v169
    %v256 = vunpack.c.h.b16 %v169
    %v257 = vunpack.c.l.b16 %v170
    %v258 = vunpack.c.h.b16 %v170
    %v259 = vunpack.c.l.b16 %v171
    %v260 = vunpack.c.h.b16 %v171
    %v261 = vunpack.c.l.b16 %v172
    %v262 = vunpack.c.h.b16 %v172
    %v263 = vunpack.c.l.b16 %v173
    %v264 = vunpack.c.h.b16 %v173
    %v265 = vunpack.c.l.b16 %v174
    %v266 = vunpack.c.h.b16 %v174
    %v267 = vunpack.c.l.b16 %v175
    %v268 = vunpack.c.h.b16 %v175
    %v269 = vunpack.c.l.b16 %v176
    %v270 = vunpack.c.h.b16 %v176
    %v271 = vunpack.c.l.b16 %v177
    %v272 = vunpack.c.h.b16 %v177
    %v273 = vunpack.c.l.b16 %v178
    %v274 = vunpack.c.h.b16 %v178
    %v275 = vunpack.c.l.b16 %v179
    %v276 = vunpack.c.h.b16 %v179
    %v277 = vunpack.c.l.b16 %v180
    %v278 = vunpack.c.h.b16 %v180
    %v279 = vunpack.c.l.b16 %v181
    %v280 = vunpack.c.h.b16 %v181
    %v281 = vunpack.c.l.b16 %v182
    %v282 = vunpack.c.h.b16 %v182
    %v283 = vunpack.c.l.b16 %v183
    %v284 = vunpack.c.h.b16 %v183
    %v285 = vunpack.c.l.b16 %v184
    %v286 = vunpack.c.h.b16 %v184
    %v287 = vunpack.c.l.b16 %v185
    %v288 = vunpack.c.h.b16 %v185
    %v289 = vunpack.c.l.b16 %v186
    %v290 = vunpack.c.h.b16 %v186
    %v291 = vunpack.c.l.b16 %v187
    %v292 = vunpack.c.h.b16 %v187
    %v293 = vunpack.c.l.b16 %v188
    %v294 = vunpack.c.h.b16 %v188
    %v295 = vunpack.c.l.b16 %v189
    %v296 = vunpack.c.h.b16 %v189
    %v297 = vunpack.c.l.b16 %v190
    %v298 = vunpack.c.h.b16 %v190
    %v299 = vpack.c.b16 %v237, %v235
    %v300 = vpack.c.b16 %v238, %v236
    %v301 = vpack.c.b16 %v241, %v239
    %v302 = vpack.c.b16 %v242, %v240
    %v303 = vpack.c.b16 %v245, %v243
    %v304 = vpack.c.b16 %v246, %v244
    %v305 = vpack.c.b16 %v249, %v247
    %v306 = vpack.c.b16 %v250, %v248
    %v307 = vpack.c.b16 %v253, %v251
    %v308 = vpack.c.b16 %v254, %v252
    %v309 = vpack.c.b16 %v257, %v255
    %v310 = vpack.c.b16 %v258, %v256
    %v311 = vpack.c.b16 %v261, %v259
    %v312 = vpack.c.b16 %v262, %v260
    %v313 = vpack.c.b16 %v265, %v263
    %v314 = vpack.c.b16 %v266, %v264
    %v315 = vpack.c.b16 %v269, %v267
    %v316 = vpack.c.b16 %v270, %v268
    %v317 = vpack.c.b16 %v273, %v271
    %v318 = vpack.c.b16 %v274, %v272
    %v319 = vpack.c.b16 %v277, %v275
    %v320 = vpack.c.b16 %v278, %v276
    %v321 = vpack.c.b16 %v281, %v279
    %v322 = vpack.c.b16 %v282, %v280
    %v323 = vpack.c.b16 %v285, %v283
    %v324 = vpack.c.b16 %v286, %v284
    %v325 = vpack.c.b16 %v289, %v287
    %v326 = vpack.c.b16 %v290, %v288
    %v327 = vpack.c.b16 %v293, %v291
    %v328 = vpack.c.b16 %v294, %v292
    %v329 = vpack.c.b16 %v297, %v295
    %v330 = vpack.c.b16 %v298, %v296
    %363 = vmatprep.subr.bf16.mxu0 %v300
    %364 = vmatpush1.bf16.msra.mxu0 %v299
    %365 = vmatprep.subr.bf16.mxu0 %v302
    %366 = vmatpush1.bf16.msra.mxu0 %v301
    %367 = vmatprep.subr.bf16.mxu0 %v304
    %368 = vmatpush1.bf16.msra.mxu0 %v303
    %369 = vmatprep.subr.bf16.mxu0 %v306
    %370 = vmatpush1.bf16.msra.mxu0 %v305
    %371 = vmatprep.subr.bf16.mxu0 %v308
    %372 = vmatpush1.bf16.msra.mxu0 %v307
    %373 = vmatprep.subr.bf16.mxu0 %v310
    %374 = vmatpush1.bf16.msra.mxu0 %v309
    %375 = vmatprep.subr.bf16.mxu0 %v312
    %376 = vmatpush1.bf16.msra.mxu0 %v311
    %377 = vmatprep.subr.bf16.mxu0 %v314
    %378 = vmatpush1.bf16.msra.mxu0 %v313
    %379 = vmatprep.subr.bf16.mxu0 %v316
    %380 = vmatpush1.bf16.msra.mxu0 %v315
    %381 = vmatprep.subr.bf16.mxu0 %v318
    %382 = vmatpush1.bf16.msra.mxu0 %v317
    %383 = vmatprep.subr.bf16.mxu0 %v320
    %384 = vmatpush1.bf16.msra.mxu0 %v319
    %385 = vmatprep.subr.bf16.mxu0 %v322
    %386 = vmatpush1.bf16.msra.mxu0 %v321
    %387 = vmatprep.subr.bf16.mxu0 %v324
    %388 = vmatpush1.bf16.msra.mxu0 %v323
    %389 = vmatprep.subr.bf16.mxu0 %v326
    %390 = vmatpush1.bf16.msra.mxu0 %v325
    %391 = vmatprep.subr.bf16.mxu0 %v328
    %392 = vmatpush1.bf16.msra.mxu0 %v327
    %393 = vmatprep.subr.bf16.mxu0 %v330
    %394 = vmatpush1.bf16.msra.mxu0 %v329
    %395 = vmatprep.mubr.bf16.mxu0 %v158
    %396 = vmatmul.mubr.bf16.gmra.mrb[0].mxu0 %v157
    %v397 = vpop.f32.mrb[0].mxu0
    %v398 = vadd.f32 %v196, %v397
    %v399 = vpop.f32.mrb[0].mxu0
    %v400 = vadd.f32 %v200, %v399
    %v401 = vpop.f32.mrb[0].mxu0
    %v402 = vpop.f32.mrb[0].mxu0
    %403 = vdwg.mxu0
    %v404 = vmax.f32 %v398, 0.0
    %v405 = vmax.f32 %v400, 0.0
    %v406 = vpack.c.bf16 %v404, %v404
    %v407 = vpack.c.bf16 %v405, %v405
    %v408 = vld [vmem:[#allocation8] sm:$0xff]
    %v409 = vld [vmem:[#allocation8 + $0x8] sm:$0xff]
    %v410 = vld [vmem:[#allocation8 + $0x10] sm:$0xff]
    %v411 = vld [vmem:[#allocation8 + $0x18] sm:$0xff]
    %v412 = vld [vmem:[#allocation8 + $0x20] sm:$0xff]
    %v413 = vld [vmem:[#allocation8 + $0x28] sm:$0xff]
    %v414 = vld [vmem:[#allocation8 + $0x30] sm:$0xff]
    %v415 = vld [vmem:[#allocation8 + $0x38] sm:$0xff]
    %v416 = vld [vmem:[#allocation8 + $0x40] sm:$0xff]
    %v417 = vld [vmem:[#allocation8 + $0x48] sm:$0xff]
    %v418 = vld [vmem:[#allocation8 + $0x50] sm:$0xff]
    %v419 = vld [vmem:[#allocation8 + $0x58] sm:$0xff]
    %v420 = vld [vmem:[#allocation8 + $0x60] sm:$0xff]
    %v421 = vld [vmem:[#allocation8 + $0x68] sm:$0xff]
    %v422 = vld [vmem:[#allocation8 + $0x70] sm:$0xff]
    %v423 = vld [vmem:[#allocation8 + $0x78] sm:$0xff]
    %v424 = vld [vmem:[#allocation8 + $0x80] sm:$0xff]
    %v425 = vld [vmem:[#allocation8 + $0x88] sm:$0xff]
    %v426 = vld [vmem:[#allocation8 + $0x90] sm:$0xff]
    %v427 = vld [vmem:[#allocation8 + $0x98] sm:$0xff]
    %v428 = vld [vmem:[#allocation8 + $0xa0] sm:$0xff]
    %v429 = vld [vmem:[#allocation8 + $0xa8] sm:$0xff]
    %v430 = vld [vmem:[#allocation8 + $0xb0] sm:$0xff]
    %v431 = vld [vmem:[#allocation8 + $0xb8] sm:$0xff]
    %v432 = vld [vmem:[#allocation8 + $0xc0] sm:$0xff]
    %v433 = vld [vmem:[#allocation8 + $0xc8] sm:$0xff]
    %v434 = vld [vmem:[#allocation8 + $0xd0] sm:$0xff]
    %v435 = vld [vmem:[#allocation8 + $0xd8] sm:$0xff]
    %v436 = vld [vmem:[#allocation8 + $0xe0] sm:$0xff]
    %v437 = vld [vmem:[#allocation8 + $0xe8] sm:$0xff]
    %v438 = vld [vmem:[#allocation8 + $0xf0] sm:$0xff]
    %v439 = vld [vmem:[#allocation8 + $0xf8] sm:$0xff]
    %v440 = vld [vmem:[%s6] sm:$0x3]
    %v442 = vlaneseq
    %v443 = vshrl.u32 %v442, 7
    %v444 = vsub.s32 0, %v443
    %v445 = vrot.slane %v440, %v444
    %v446 = vlaneseq
    %v447 = vshrl.u32 %v446, 7
    %v448 = vsub.s32 1, %v447
    %v449 = vrot.slane %v440, %v448
    %v484 = vunpack.c.l.b16 %v408
    %v485 = vunpack.c.h.b16 %v408
    %v486 = vunpack.c.l.b16 %v409
    %v487 = vunpack.c.h.b16 %v409
    %v488 = vunpack.c.l.b16 %v410
    %v489 = vunpack.c.h.b16 %v410
    %v490 = vunpack.c.l.b16 %v411
    %v491 = vunpack.c.h.b16 %v411
    %v492 = vunpack.c.l.b16 %v412
    %v493 = vunpack.c.h.b16 %v412
    %v494 = vunpack.c.l.b16 %v413
    %v495 = vunpack.c.h.b16 %v413
    %v496 = vunpack.c.l.b16 %v414
    %v497 = vunpack.c.h.b16 %v414
    %v498 = vunpack.c.l.b16 %v415
    %v499 = vunpack.c.h.b16 %v415
    %v500 = vunpack.c.l.b16 %v416
    %v501 = vunpack.c.h.b16 %v416
    %v502 = vunpack.c.l.b16 %v417
    %v503 = vunpack.c.h.b16 %v417
    %v504 = vunpack.c.l.b16 %v418
    %v505 = vunpack.c.h.b16 %v418
    %v506 = vunpack.c.l.b16 %v419
    %v507 = vunpack.c.h.b16 %v419
    %v508 = vunpack.c.l.b16 %v420
    %v509 = vunpack.c.h.b16 %v420
    %v510 = vunpack.c.l.b16 %v421
    %v511 = vunpack.c.h.b16 %v421
    %v512 = vunpack.c.l.b16 %v422
    %v513 = vunpack.c.h.b16 %v422
    %v514 = vunpack.c.l.b16 %v423
    %v515 = vunpack.c.h.b16 %v423
    %v516 = vunpack.c.l.b16 %v424
    %v517 = vunpack.c.h.b16 %v424
    %v518 = vunpack.c.l.b16 %v425
    %v519 = vunpack.c.h.b16 %v425
    %v520 = vunpack.c.l.b16 %v426
    %v521 = vunpack.c.h.b16 %v426
    %v522 = vunpack.c.l.b16 %v427
    %v523 = vunpack.c.h.b16 %v427
    %v524 = vunpack.c.l.b16 %v428
    %v525 = vunpack.c.h.b16 %v428
    %v526 = vunpack.c.l.b16 %v429
    %v527 = vunpack.c.h.b16 %v429
    %v528 = vunpack.c.l.b16 %v430
    %v529 = vunpack.c.h.b16 %v430
    %v530 = vunpack.c.l.b16 %v431
    %v531 = vunpack.c.h.b16 %v431
    %v532 = vunpack.c.l.b16 %v432
    %v533 = vunpack.c.h.b16 %v432
    %v534 = vunpack.c.l.b16 %v433
    %v535 = vunpack.c.h.b16 %v433
    %v536 = vunpack.c.l.b16 %v434
    %v537 = vunpack.c.h.b16 %v434
    %v538 = vunpack.c.l.b16 %v435
    %v539 = vunpack.c.h.b16 %v435
    %v540 = vunpack.c.l.b16 %v436
    %v541 = vunpack.c.h.b16 %v436
    %v542 = vunpack.c.l.b16 %v437
    %v543 = vunpack.c.h.b16 %v437
    %v544 = vunpack.c.l.b16 %v438
    %v545 = vunpack.c.h.b16 %v438
    %v546 = vunpack.c.l.b16 %v439
    %v547 = vunpack.c.h.b16 %v439
    %v548 = vpack.c.b16 %v486, %v484
    %v549 = vpack.c.b16 %v487, %v485
    %v550 = vpack.c.b16 %v490, %v488
    %v551 = vpack.c.b16 %v491, %v489
    %v552 = vpack.c.b16 %v494, %v492
    %v553 = vpack.c.b16 %v495, %v493
    %v554 = vpack.c.b16 %v498, %v496
    %v555 = vpack.c.b16 %v499, %v497
    %v556 = vpack.c.b16 %v502, %v500
    %v557 = vpack.c.b16 %v503, %v501
    %v558 = vpack.c.b16 %v506, %v504
    %v559 = vpack.c.b16 %v507, %v505
    %v560 = vpack.c.b16 %v510, %v508
    %v561 = vpack.c.b16 %v511, %v509
    %v562 = vpack.c.b16 %v514, %v512
    %v563 = vpack.c.b16 %v515, %v513
    %v564 = vpack.c.b16 %v518, %v516
    %v565 = vpack.c.b16 %v519, %v517
    %v566 = vpack.c.b16 %v522, %v520
    %v567 = vpack.c.b16 %v523, %v521
    %v568 = vpack.c.b16 %v526, %v524
    %v569 = vpack.c.b16 %v527, %v525
    %v570 = vpack.c.b16 %v530, %v528
    %v571 = vpack.c.b16 %v531, %v529
    %v572 = vpack.c.b16 %v534, %v532
    %v573 = vpack.c.b16 %v535, %v533
    %v574 = vpack.c.b16 %v538, %v536
    %v575 = vpack.c.b16 %v539, %v537
    %v576 = vpack.c.b16 %v542, %v540
    %v577 = vpack.c.b16 %v543, %v541
    %v578 = vpack.c.b16 %v546, %v544
    %v579 = vpack.c.b16 %v547, %v545
    %612 = vmatprep.subr.bf16.mxu0 %v549
    %613 = vmatpush1.bf16.msra.mxu0 %v548
    %614 = vmatprep.subr.bf16.mxu0 %v551
    %615 = vmatpush1.bf16.msra.mxu0 %v550
    %616 = vmatprep.subr.bf16.mxu0 %v553
    %617 = vmatpush1.bf16.msra.mxu0 %v552
    %618 = vmatprep.subr.bf16.mxu0 %v555
    %619 = vmatpush1.bf16.msra.mxu0 %v554
    %620 = vmatprep.subr.bf16.mxu0 %v557
    %621 = vmatpush1.bf16.msra.mxu0 %v556
    %622 = vmatprep.subr.bf16.mxu0 %v559
    %623 = vmatpush1.bf16.msra.mxu0 %v558
    %624 = vmatprep.subr.bf16.mxu0 %v561
    %625 = vmatpush1.bf16.msra.mxu0 %v560
    %626 = vmatprep.subr.bf16.mxu0 %v563
    %627 = vmatpush1.bf16.msra.mxu0 %v562
    %628 = vmatprep.subr.bf16.mxu0 %v565
    %629 = vmatpush1.bf16.msra.mxu0 %v564
    %630 = vmatprep.subr.bf16.mxu0 %v567
    %631 = vmatpush1.bf16.msra.mxu0 %v566
    %632 = vmatprep.subr.bf16.mxu0 %v569
    %633 = vmatpush1.bf16.msra.mxu0 %v568
    %634 = vmatprep.subr.bf16.mxu0 %v571
    %635 = vmatpush1.bf16.msra.mxu0 %v570
    %636 = vmatprep.subr.bf16.mxu0 %v573
    %637 = vmatpush1.bf16.msra.mxu0 %v572
    %638 = vmatprep.subr.bf16.mxu0 %v575
    %639 = vmatpush1.bf16.msra.mxu0 %v574
    %640 = vmatprep.subr.bf16.mxu0 %v577
    %641 = vmatpush1.bf16.msra.mxu0 %v576
    %642 = vmatprep.subr.bf16.mxu0 %v579
    %643 = vmatpush1.bf16.msra.mxu0 %v578
    %644 = vmatprep.mubr.bf16.mxu0 %v407
    %645 = vmatmul.mubr.bf16.gmra.mrb[0].mxu0 %v406
    %v646 = vpop.f32.mrb[0].mxu0
    %v647 = vadd.f32 %v445, %v646
    %v648 = vpop.f32.mrb[0].mxu0
    %v649 = vadd.f32 %v449, %v648
    %v650 = vpop.f32.mrb[0].mxu0
    %v651 = vpop.f32.mrb[0].mxu0
    %652 = vdwg.mxu0
    %653 = vst [vmem:[#allocation10] sm:$0xff] %v647
    %v654 = vtanh.pop %v649
    %v655 = vmul.f32 %v654, 3.5
    %v656 = vadd.f32 %v655, -1.5
    %657 = vst [vmem:[#allocation11] sm:$0xff] %v656
    // Predicated region
    $region46: #{tpu_custom_call.1} parent=1 // pred_check
      _
    $region47: #{tpu_custom_call.1} parent=1 // pred_check_branch
      %659 = sbr.rel (0) target = $region49
    $region48: #{tpu_custom_call.1} parent=1 // pred_region
      %s661 = ssub.s32 128, 128
      %662 = vsyncadd [#allocation4], %s661
      %s664 = sshll.u32 [#allocation10], 4
      %s665 = int_to_ptr.vmem [resolvable:$true] %s664
      %667 = dma.vmem_to_hbm [thread:$0]  %s665, 128, %s7, [#allocation4]
    $region49: #{tpu_custom_call.1} parent=1 // pred_fallthru
      _
    // Predicated region
    $region50: #{tpu_custom_call.1} parent=1 // pred_check
      _
    $region51: #{tpu_custom_call.1} parent=1 // pred_check_branch
      %669 = sbr.rel (0) target = $region53
    $region52: #{tpu_custom_call.1} parent=1 // pred_region
      %s671 = ssub.s32 128, 128
      %672 = vsyncadd [#allocation12], %s671
      %s674 = sshll.u32 [#allocation11], 4
      %s675 = int_to_ptr.vmem [resolvable:$true] %s674
      %677 = dma.vmem_to_hbm [thread:$0]  %s675, 128, %s8, [#allocation12]
    $region53: #{tpu_custom_call.1} parent=1 // pred_fallthru
      _
    // Predicated region
    $region54: #{tpu_custom_call.1} parent=1 // pred_check
      _
    $region55: #{tpu_custom_call.1} parent=1 // pred_check_branch
      %679 = sbr.rel (0) target = $region57
    $region56: #{tpu_custom_call.1} parent=1 // pred_region
      %680 = dma.done [#allocation4], 128
    $region57: #{tpu_custom_call.1} parent=1 // pred_fallthru
      _
    // Predicated region
    $region58: #{tpu_custom_call.1} parent=1 // pred_check
      _
    $region59: #{tpu_custom_call.1} parent=1 // pred_check_branch
      %682 = sbr.rel (0) target = $region61
    $region60: #{tpu_custom_call.1} parent=1 // pred_region
      %683 = dma.done [#allocation12], 128
    $region61: #{tpu_custom_call.1} parent=1 // pred_fallthru
      _
    %684 = vsyncpa [#allocation3], 1
    %685 = vsyncpa [#allocation6], 1
    %686 = vsyncpa [#allocation9], 1
    %687 = vsyncpa [#allocation4], 1
    %688 = vsyncpa [#allocation12], 1

</llo_original>
